<compile_context>
chip_gen: v7x
topology: tpu7x:2x2x1
jax: 0.10.0
libtpu: 0.0.40
codegen_flags: <defaults>
</compile_context>

<pallas_src>
import functools

import jax
import jax.numpy as jnp
from jax import lax
from jax.experimental import pallas as pl
from jax.experimental.pallas import tpu as pltpu

_MIB = 1024 * 1024


def _sublane_count(dtype):
    itemsize = jnp.dtype(dtype).itemsize
    return {4: 8, 2: 16, 1: 32}.get(itemsize, 8)


def _vmem_budgets():
    """Return (working-set budget, vmem_limit_bytes), generation-aware."""
    try:
        cap = int(getattr(pltpu.get_tpu_info(), "vmem_capacity_bytes"))
    except Exception:
        cap = 64 * _MIB  # conservative fallback (v7x per-TensorCore VMEM)
    vmem_limit = min(cap // 2, 64 * _MIB)  # 32 MiB on v7x, 64 MiB on v5e/v6e
    budget = int(vmem_limit * 0.75)        # headroom for compiler scratch
    return budget, vmem_limit


def _pick_tiles(b, c, hw, dtype, budget_bytes):
    """Pick (bb, t): batch block and HW tile.

    Working set per grid step ~ 2 arrays (in+out) x 2 buffers (pipeline)
    x bb x c_padded x t x itemsize; keep it within `budget_bytes` while
    maximizing bytes-per-DMA to amortize the ~0.35 us per-step overhead.
    """
    itemsize = jnp.dtype(dtype).itemsize
    sub = _sublane_count(dtype)
    c_pad = ((c + sub - 1) // sub) * sub  # physical sublane footprint

    def step_bytes(bb, t):
        return 4 * bb * c_pad * t * itemsize

    if hw % 128 != 0:
        t = hw  # full-extent fallback (wrapper normally pads, so unreachable)
    else:
        t = 128
        cand = hw
        while cand >= 128:
            if hw % cand == 0 and step_bytes(1, cand) <= budget_bytes:
                t = cand
                break
            cand -= 128

    bb = 1
    for cand in range(b, 0, -1):
        if b % cand != 0:
            continue
        if step_bytes(cand, t) > budget_bytes:
            continue
        # Keep >= 2 grid steps when possible (megacore / v7x dual TensorCore).
        if hw // t == 1 and b > 1 and b // cand < 2:
            continue
        bb = cand
        break
    return bb, t


def _ln2d_kernel(x_ref, w_ref, b_ref, o_ref, *, eps):
    # x_ref: (bb, C, T) tile; per-pixel normalization over channels (axis=1).
    xv = x_ref[...].astype(jnp.float32)
    mu = jnp.mean(xv, axis=1, keepdims=True)          # (bb, 1, T)
    xc = xv - mu
    var = jnp.mean(xc * xc, axis=1, keepdims=True)    # (bb, 1, T)
    y = xc * lax.rsqrt(var + eps)                     # rsqrt -> EUP slot
    o_ref[...] = (y * w_ref[...] + b_ref[...]).astype(o_ref.dtype)


def layernorm2d(x, weight, bias, eps=1e-6):
    """LayerNorm2d forward: x (B, C, H, W), per-channel weight/bias (C,)."""
    b, c, h, w = x.shape
    hw = h * w
    x3 = x.reshape(b, c, hw)  # free reshape, no transpose

    # Pad H*W to a lane-dense multiple of 128 (unmasked stores); crop after.
    hw_pad = hw if hw % 128 == 0 else ((hw + 127) // 128) * 128
    if hw_pad != hw:
        x3 = jnp.pad(x3, ((0, 0), (0, 0), (0, hw_pad - hw)))

    budget, vmem_limit = _vmem_budgets()
    bb, t = _pick_tiles(b, c, hw_pad, x.dtype, budget)
    grid = (b // bb, hw_pad // t)

    kernel = functools.partial(_ln2d_kernel, eps=eps)
    out = pl.pallas_call(
        kernel,
        out_shape=jax.ShapeDtypeStruct((b, c, hw_pad), x.dtype),
        grid=grid,
        in_specs=[
            pl.BlockSpec((bb, c, t), lambda i, j: (i, 0, j)),
            pl.BlockSpec((1, c, 1), lambda i, j: (0, 0, 0)),
            pl.BlockSpec((1, c, 1), lambda i, j: (0, 0, 0)),
        ],
        out_specs=pl.BlockSpec((bb, c, t), lambda i, j: (i, 0, j)),
        compiler_params=pltpu.CompilerParams(
            dimension_semantics=("parallel", "parallel"),
            vmem_limit_bytes=vmem_limit),
    )(
        x3,
        weight.reshape(1, c, 1).astype(jnp.float32),
        bias.reshape(1, c, 1).astype(jnp.float32),
    )
    if hw_pad != hw:
        out = out[:, :, :hw]
    return out.reshape(b, c, h, w)


def _reference_layernorm2d(x, weight, bias, eps=1e-6):
    # Pure-JAX mirror of LayerNormFunction.forward (torch semantics).
    xf = x.astype(jnp.float32)
    mu = jnp.mean(xf, axis=1, keepdims=True)
    var = jnp.mean((xf - mu) ** 2, axis=1, keepdims=True)
    y = (xf - mu) / jnp.sqrt(var + eps)
    c = x.shape[1]
    out = weight.reshape(1, c, 1, 1) * y + bias.reshape(1, c, 1, 1)
    return out.astype(x.dtype)


if __name__ == "__main__":
    B, C, H, W = 2, 4, 16, 16

    key = jax.random.PRNGKey(0)
    kx, kw, kb = jax.random.split(key, 3)
    x = jax.random.normal(kx, (B, C, H, W), dtype=jnp.float32)
    # Non-trivial weight/bias so the affine part is actually exercised.
    weight = 1.0 + 0.1 * jax.random.normal(kw, (C,), dtype=jnp.float32)
    bias = 0.1 * jax.random.normal(kb, (C,), dtype=jnp.float32)

    fwd = jax.jit(layernorm2d)
    out = fwd(x, weight, bias)
    out = jax.block_until_ready(out)

    ref = _reference_layernorm2d(x, weight, bias)
    assert out.shape == (B, C, H, W)
    assert jnp.allclose(out, ref, atol=1e-4, rtol=1e-4)
    print("KERNEL_OK")
</pallas_src>

<mosaic_0001>
module attributes {stable_mosaic.version = 11 : i64} {
  func.func @_ln2d_kernel(%arg0: i32, %arg1: i32, %arg2: memref<1x4x256xf32, #tpu.memory_space<vmem>>, %arg3: memref<1x4x1xf32, #tpu.memory_space<vmem>>, %arg4: memref<1x4x1xf32, #tpu.memory_space<vmem>>, %arg5: memref<1x4x256xf32, #tpu.memory_space<vmem>>) attributes {dimension_semantics = [#tpu.dimension_semantics<parallel>, #tpu.dimension_semantics<parallel>], iteration_bounds = array<i64: 2, 1>, scalar_prefetch = 0 : i64, scratch_operands = 0 : i64, tpu.core_type = #tpu.core_type<tc>, window_params = [{transform_indices = @transform_0, window_bounds = array<i64: 1, 4, 256>}, {pipeline_mode = #tpu.pipeline_mode<synchronous>, transform_indices = @transform_1, window_bounds = array<i64: 1, 4, 1>}, {pipeline_mode = #tpu.pipeline_mode<synchronous>, transform_indices = @transform_2, window_bounds = array<i64: 1, 4, 1>}, {transform_indices = @transform_3, window_bounds = array<i64: 1, 4, 256>}]} {
    %c0 = arith.constant 0 : index
    %c0_0 = arith.constant 0 : index
    %c0_1 = arith.constant 0 : index
    %0 = vector.load %arg2[%c0, %c0_0, %c0_1] : memref<1x4x256xf32, #tpu.memory_space<vmem>>, vector<1x4x256xf32>
    %cst = arith.constant dense<0.000000e+00> : vector<1x256xf32>
    %1 = vector.multi_reduction <add>, %0, %cst [1] : vector<1x4x256xf32> to vector<1x256xf32>
    %2 = vector.shape_cast %1 : vector<1x256xf32> to vector<1x1x256xf32>
    %cst_2 = arith.constant 4.000000e+00 : f32
    %3 = vector.broadcast %cst_2 : f32 to vector<1x1x256xf32>
    %4 = arith.divf %2, %3 : vector<1x1x256xf32>
    %5 = vector.broadcast %4 : vector<1x1x256xf32> to vector<1x4x256xf32>
    %6 = arith.subf %0, %5 : vector<1x4x256xf32>
    %7 = arith.mulf %6, %6 : vector<1x4x256xf32>
    %cst_3 = arith.constant dense<0.000000e+00> : vector<1x256xf32>
    %8 = vector.multi_reduction <add>, %7, %cst_3 [1] : vector<1x4x256xf32> to vector<1x256xf32>
    %9 = vector.shape_cast %8 : vector<1x256xf32> to vector<1x1x256xf32>
    %cst_4 = arith.constant 4.000000e+00 : f32
    %10 = vector.broadcast %cst_4 : f32 to vector<1x1x256xf32>
    %11 = arith.divf %9, %10 : vector<1x1x256xf32>
    %cst_5 = arith.constant 9.99999997E-7 : f32
    %12 = vector.broadcast %cst_5 : f32 to vector<1x1x256xf32>
    %13 = arith.addf %11, %12 : vector<1x1x256xf32>
    %14 = math.rsqrt %13 : vector<1x1x256xf32>
    %15 = vector.broadcast %14 : vector<1x1x256xf32> to vector<1x4x256xf32>
    %16 = arith.mulf %6, %15 : vector<1x4x256xf32>
    %c0_6 = arith.constant 0 : index
    %c0_7 = arith.constant 0 : index
    %c0_8 = arith.constant 0 : index
    %17 = vector.load %arg3[%c0_6, %c0_7, %c0_8] : memref<1x4x1xf32, #tpu.memory_space<vmem>>, vector<1x4x1xf32>
    %18 = vector.broadcast %17 : vector<1x4x1xf32> to vector<1x4x256xf32>
    %19 = arith.mulf %16, %18 : vector<1x4x256xf32>
    %c0_9 = arith.constant 0 : index
    %c0_10 = arith.constant 0 : index
    %c0_11 = arith.constant 0 : index
    %20 = vector.load %arg4[%c0_9, %c0_10, %c0_11] : memref<1x4x1xf32, #tpu.memory_space<vmem>>, vector<1x4x1xf32>
    %21 = vector.broadcast %20 : vector<1x4x1xf32> to vector<1x4x256xf32>
    %22 = arith.addf %19, %21 : vector<1x4x256xf32>
    %c0_12 = arith.constant 0 : index
    %c0_13 = arith.constant 0 : index
    %c0_14 = arith.constant 0 : index
    %23 = vector.load %arg5[%c0_12, %c0_13, %c0_14] : memref<1x4x256xf32, #tpu.memory_space<vmem>>, vector<1x4x256xf32>
    tpu.vector_store %arg5[%c0_12, %c0_13, %c0_14], %22 {strides = array<i32>} : memref<1x4x256xf32, #tpu.memory_space<vmem>>, vector<1x4x256xf32>,
    return
  }
  func.func @transform_0(%arg0: i32, %arg1: i32) -> (i32, i32, i32) {
    %c0_i32 = arith.constant 0 : i32
    %c0_i32_0 = arith.constant 0 : i32
    return %arg0, %c0_i32, %arg1 : i32, i32, i32
  }
  func.func @transform_1(%arg0: i32, %arg1: i32) -> (i32, i32, i32) {
    %c0_i32 = arith.constant 0 : i32
    %c0_i32_0 = arith.constant 0 : i32
    %c0_i32_1 = arith.constant 0 : i32
    %c0_i32_2 = arith.constant 0 : i32
    return %c0_i32, %c0_i32_0, %c0_i32_1 : i32, i32, i32
  }
  func.func @transform_2(%arg0: i32, %arg1: i32) -> (i32, i32, i32) {
    %c0_i32 = arith.constant 0 : i32
    %c0_i32_0 = arith.constant 0 : i32
    %c0_i32_1 = arith.constant 0 : i32
    %c0_i32_2 = arith.constant 0 : i32
    return %c0_i32, %c0_i32_0, %c0_i32_1 : i32, i32, i32
  }
  func.func @transform_3(%arg0: i32, %arg1: i32) -> (i32, i32, i32) {
    %c0_i32 = arith.constant 0 : i32
    %c0_i32_0 = arith.constant 0 : i32
    return %arg0, %c0_i32, %arg1 : i32, i32, i32
  }
}

</mosaic_0001>

<llo_original>
// kernel: layernorm2d.1
$region0: #{layernorm2d.1}
  #allocation0 [shape = 'u32[]', space=smem, size = 0x4, offset = 0x4, fixed_abs, tag = 'smem constant byte address 0x4 - core index']
  #allocation1 [shape = 'u32[144,128]{1,0:T(1,128)}', space=vmem, size = 0x12000, scoped, tag = 'internal scratch']
  %s0 = inlined_call_operand.vmem [shape: f32[2,4,256], index: 0, kind: input, shape index: {}]
  %s1 = inlined_call_operand.vmem [shape: f32[1,4,1], index: 1, kind: input, shape index: {}]
  %s2 = inlined_call_operand.vmem [shape: f32[1,4,1], index: 2, kind: input, shape index: {}]
  %s3 = inlined_call_operand.vmem [shape: f32[2,4,256], index: 3, kind: output, shape index: {}]
  %s4 = sld [smem:[#allocation0]]
  $region45: #{layernorm2d.1} parent=0
    _
  %s6 = ssub.s32 1, %s4
  %s7 = scalar_select 0, %s6, %s4
  loop: start=0, step=1, limit=4
  $region2: #{layernorm2d.1} parent=0 // loop_pre_header
    _
  $region3: #{layernorm2d.1} parent=0 // loop_header
    %s9 = sphi 0, %s13
    %p10 = scmp.ge.s32.totalorder %s9, 4
    %s16 = sphi 0, %s28
    %s17 = sphi 0, %s24
    %s18 = sphi 0, %s16
    %s19 = sphi 0, %s17
    %s20 = sphi 0, %s18
    %s21 = sphi 0, %s19
    %s33 = sphi 0, %s35
    %s36 = sphi 0, %s33
    %s37 = sphi 0, %s36
    %s53 = sphi 0, %s37
    %s57 = sphi 0, %s57
    %s59 = sphi 0, %s57
    %s60 = sphi 0, %s59
    %s74 = sphi 0, %s60
    %s78 = sphi 0, %s78
    %s80 = sphi 0, %s78
    %s81 = sphi 0, %s80
    %s95 = sphi 0, %s81
    %s103 = sphi 0, %s105
    %s106 = sphi 0, %s103
    %s107 = sphi 0, %s106
    %s123 = sphi 0, %s107
  $region4: #{layernorm2d.1} parent=0 // loop_header_branch
    %12 = sbr.rel (%p10) target = $region8
  $region5: #{layernorm2d.1} parent=0 // loop_body
    %s14 = ssub.s32 %s9, 1
    %s15 = ssub.s32 %s9, 2
    %s22 = sadd.s32 1, %s17
    %p23 = scmp.ge.s32.totalorder %s22, 1
    %s24 = scalar_select %p23, 0, %s22
    %s25 = sadd.s32 1, %s16
    %s26 = scalar_select %p23, %s25, %s16
    %p27 = scmp.ge.s32.totalorder %s26, 2
    %s28 = scalar_select %p27, 0, %s26
    %s29 = ssub.s32 %s16, %s28
    %s30 = ssub.s32 %s17, %s24
    %s31 = sor.u32 %s29, %s30
    %p32 = scmp.eq.s32.totalorder %s31, 0
    %s34 = sadd.s32 %s33, 1
    %s35 = scalar_select %p32, %s33, %s34
    %p38 = pneg %p32
    %p39 = scmp.eq.s32.totalorder %s9, 1
    %p40 = por %p38, %p39
    %p41 = scmp.ne.s32.totalorder %s33, %s36
    %p42 = scmp.eq.s32.totalorder %s9, 0
    %p43 = por %p41, %p42
    %p44 = scmp.ne.s32.totalorder %s33, %s36
    %p45 = scmp.eq.s32.totalorder %s14, 1
    %p46 = por %p44, %p45
    %p47 = scmp.ne.s32.totalorder %s36, %s37
    %p48 = scmp.eq.s32.totalorder %s14, 0
    %p49 = por %p47, %p48
    %p50 = scmp.ne.s32.totalorder %s36, %s37
    %p51 = scmp.eq.s32.totalorder %s15, 1
    %p52 = por %p50, %p51
    %p54 = scmp.ne.s32.totalorder %s37, %s53
    %p55 = scmp.eq.s32.totalorder %s15, 0
    %p56 = por %p54, %p55
    %s58 = sadd.s32 %s57, 1
    %p61 = scmp.eq.s32.totalorder %s9, 1
    %p62 = scmp.ne.s32.totalorder %s57, %s59
    %p63 = scmp.eq.s32.totalorder %s9, 0
    %p64 = por %p62, %p63
    %p65 = scmp.ne.s32.totalorder %s57, %s59
    %p66 = scmp.eq.s32.totalorder %s14, 1
    %p67 = por %p65, %p66
    %p68 = scmp.ne.s32.totalorder %s59, %s60
    %p69 = scmp.eq.s32.totalorder %s14, 0
    %p70 = por %p68, %p69
    %p71 = scmp.ne.s32.totalorder %s59, %s60
    %p72 = scmp.eq.s32.totalorder %s15, 1
    %p73 = por %p71, %p72
    %p75 = scmp.ne.s32.totalorder %s60, %s74
    %p76 = scmp.eq.s32.totalorder %s15, 0
    %p77 = por %p75, %p76
    %s79 = sadd.s32 %s78, 1
    %p82 = scmp.eq.s32.totalorder %s9, 1
    %p83 = scmp.ne.s32.totalorder %s78, %s80
    %p84 = scmp.eq.s32.totalorder %s9, 0
    %p85 = por %p83, %p84
    %p86 = scmp.ne.s32.totalorder %s78, %s80
    %p87 = scmp.eq.s32.totalorder %s14, 1
    %p88 = por %p86, %p87
    %p89 = scmp.ne.s32.totalorder %s80, %s81
    %p90 = scmp.eq.s32.totalorder %s14, 0
    %p91 = por %p89, %p90
    %p92 = scmp.ne.s32.totalorder %s80, %s81
    %p93 = scmp.eq.s32.totalorder %s15, 1
    %p94 = por %p92, %p93
    %p96 = scmp.ne.s32.totalorder %s81, %s95
    %p97 = scmp.eq.s32.totalorder %s15, 0
    %p98 = por %p96, %p97
    %s99 = ssub.s32 %s16, %s28
    %s100 = ssub.s32 %s17, %s24
    %s101 = sor.u32 %s99, %s100
    %p102 = scmp.eq.s32.totalorder %s101, 0
    %s104 = sadd.s32 %s103, 1
    %s105 = scalar_select %p102, %s103, %s104
    %p108 = pneg %p102
    %p109 = scmp.eq.s32.totalorder %s9, 1
    %p110 = por %p108, %p109
    %p111 = scmp.ne.s32.totalorder %s103, %s106
    %p112 = scmp.eq.s32.totalorder %s9, 0
    %p113 = por %p111, %p112
    %p114 = scmp.ne.s32.totalorder %s103, %s106
    %p115 = scmp.eq.s32.totalorder %s14, 1
    %p116 = por %p114, %p115
    %p117 = scmp.ne.s32.totalorder %s106, %s107
    %p118 = scmp.eq.s32.totalorder %s14, 0
    %p119 = por %p117, %p118
    %p120 = scmp.ne.s32.totalorder %s106, %s107
    %p121 = scmp.eq.s32.totalorder %s15, 1
    %p122 = por %p120, %p121
    %p124 = scmp.ne.s32.totalorder %s107, %s123
    %p125 = scmp.eq.s32.totalorder %s15, 0
    %p126 = por %p124, %p125
    %p127 = scmp.le.s32.totalorder 1, %s9
    %p128 = scmp.lt.s32.totalorder %s9, 3
    %p129 = pnand %p127, %p128
    %p130 = pneg %p129
    // Predicated region
    $region9: #{layernorm2d.1} parent=5 // pred_check
      _
    $region10: #{layernorm2d.1} parent=5 // pred_check_branch
      %132 = sbr.rel (%p129) target = $region12
    $region11: #{layernorm2d.1} parent=5 // pred_region
      %s133 = ssub.s32 %s9, 1
      // Predicated region
      $region13: #{layernorm2d.1} parent=11 // pred_check
        %p134 = pneg %p70
      $region14: #{layernorm2d.1} parent=11 // pred_check_branch
        %136 = sbr.rel (%p134) target = $region16
      $region15: #{layernorm2d.1} parent=11 // pred_region
        _
      $region16: #{layernorm2d.1} parent=11 // pred_fallthru
        _
      // Predicated region
      $region17: #{layernorm2d.1} parent=11 // pred_check
        %p137 = pneg %p91
      $region18: #{layernorm2d.1} parent=11 // pred_check_branch
        %139 = sbr.rel (%p137) target = $region20
      $region19: #{layernorm2d.1} parent=11 // pred_region
        _
      $region20: #{layernorm2d.1} parent=11 // pred_fallthru
        _
    $region12: #{layernorm2d.1} parent=5 // pred_fallthru
      _
    %p140 = scmp.lt.s32.totalorder %s9, 2
    // Predicated region
    $region21: #{layernorm2d.1} parent=5 // pred_check
      %p141 = pneg %p140
    $region22: #{layernorm2d.1} parent=5 // pred_check_branch
      %143 = sbr.rel (%p141) target = $region24
    $region23: #{layernorm2d.1} parent=5 // pred_region
      // Predicated region
      $region25: #{layernorm2d.1} parent=23 // pred_check
        %p144 = pneg %p43
      $region26: #{layernorm2d.1} parent=23 // pred_check_branch
        %146 = sbr.rel (%p144) target = $region28
      $region27: #{layernorm2d.1} parent=23 // pred_region
        %s147 = smul.u32 2, %s17
        %p148 = scmp.lt.s32.totalorder %s16, 1
        %s149 = scalar_select %p148, %s16, 1
        %p150 = scmp.lt.s32.totalorder %s147, 1
        %s151 = scalar_select %p150, %s147, 1
        %s152 = smul.addr %s149, 2
        %s153 = sadd.s32 %s151, %s152
        %s154 = smul.addr %s153, 4
        %s155 = scalar_lea.vmem %s0, %s154
        %s156 = smul.u32 2, %s17
      $region28: #{layernorm2d.1} parent=23 // pred_fallthru
        _
    $region24: #{layernorm2d.1} parent=5 // pred_fallthru
      _
    %p157 = scmp.le.s32.totalorder 1, %s9
    %p158 = scmp.lt.s32.totalorder %s9, 3
    %p159 = pnand %p157, %p158
    %p160 = pneg %p159
    // Predicated region
    $region29: #{layernorm2d.1} parent=5 // pred_check
      _
    $region30: #{layernorm2d.1} parent=5 // pred_check_branch
      %162 = sbr.rel (%p159) target = $region32
    $region31: #{layernorm2d.1} parent=5 // pred_region
      %s163 = ssub.s32 %s9, 1
      %s164 = smul.u32 2, %s19
      %p165 = scmp.lt.s32.totalorder %s18, 1
      %s166 = scalar_select %p165, %s18, 1
      %p167 = scmp.lt.s32.totalorder %s164, 1
      %s168 = scalar_select %p167, %s164, 1
      %s169 = smul.addr %s166, 2
      %s170 = sadd.s32 %s168, %s169
      %s171 = smul.addr %s170, 4
      %s172 = scalar_lea.vmem %s0, %s171
      %p173 = pneg %p49
      %p174 = pneg %p46
      %p175 = pneg %p70
      %p176 = pneg %p67
      %p177 = pneg %p91
      %p178 = pneg %p88
      %p179 = pneg %p119
      %p180 = pneg %p116
      %s181 = smul.u32 2, %s19
      %p182 = scmp.lt.s32.totalorder %s18, 1
      %s183 = scalar_select %p182, %s18, 1
      %p184 = scmp.lt.s32.totalorder %s181, 1
      %s185 = scalar_select %p184, %s181, 1
      %s186 = smul.addr %s183, 2
      %s187 = sadd.s32 %s185, %s186
      %s188 = smul.addr %s187, 4
      %s189 = scalar_lea.vmem %s3, %s188
      %s190 = smul.u32 2, %s19
      %p191 = scmp.lt.s32.totalorder %s18, 1
      %s192 = scalar_select %p191, %s18, 1
      %p193 = scmp.lt.s32.totalorder %s190, 1
      %s194 = scalar_select %p193, %s190, 1
      %s195 = smul.addr %s192, 2
      %s196 = sadd.s32 %s194, %s195
      %s197 = smul.addr %s196, 4
      %s198 = scalar_lea.vmem %s0, %s197
      %s199 = smul.u32 2, %s19
      %s200 = smul.u32 2, %s19
      %p201 = scmp.lt.s32.totalorder %s18, 1
      %s202 = scalar_select %p201, %s18, 1
      %p203 = scmp.lt.s32.totalorder %s200, 1
      %s204 = scalar_select %p203, %s200, 1
      %s205 = smul.addr %s202, 2
      %s206 = sadd.s32 %s204, %s205
      %s207 = smul.addr %s206, 4
      %s208 = scalar_lea.vmem %s3, %s207
      %s209 = smul.u32 2, %s19
      %v210 = vld [vmem:[%s198] sm:$0xff]
      %v212 = vcombine.high %v210, %v210
      %vm214 = vcmask 1043456
      %v215 = vsel %vm214, %v210, 0.0
      %v216 = vrot.slane %v215, 4
      %v217 = vadd.f32 %v215, %v216
      %v218 = vrot.slane %v217, 2
      %v219 = vadd.f32 %v217, %v218
      %v220 = vrot.slane %v219, 1
      %v221 = vadd.f32 %v219, %v220
      %v222 = vsel %vm214, %v212, 0.0
      %v223 = vrot.slane %v222, 4
      %v224 = vadd.f32 %v222, %v223
      %v225 = vrot.slane %v224, 2
      %v226 = vadd.f32 %v224, %v225
      %v227 = vrot.slane %v226, 1
      %v228 = vadd.f32 %v226, %v227
      %v229 = vrcp.pop 4.0
      %v230 = vmul.f32 %v221, %v229
      %v231 = vmul.f32 %v228, %v229
      %v234 = vcombine.low %v230, %v231
      %v236 = vsub.f32 %v210, %v234
      %v237 = vmul.f32 %v236, %v236
      %v239 = vcombine.high %v237, %v237
      %v241 = vsel %vm214, %v237, 0.0
      %v242 = vrot.slane %v241, 4
      %v243 = vadd.f32 %v241, %v242
      %v244 = vrot.slane %v243, 2
      %v245 = vadd.f32 %v243, %v244
      %v246 = vrot.slane %v245, 1
      %v247 = vadd.f32 %v245, %v246
      %v248 = vsel %vm214, %v239, 0.0
      %v249 = vrot.slane %v248, 4
      %v250 = vadd.f32 %v248, %v249
      %v251 = vrot.slane %v250, 2
      %v252 = vadd.f32 %v250, %v251
      %v253 = vrot.slane %v252, 1
      %v254 = vadd.f32 %v252, %v253
      %v255 = vmul.f32 %v247, %v229
      %v256 = vmul.f32 %v254, %v229
      %v257 = vadd.f32 %v255, 1e-06
      %v258 = vadd.f32 %v256, 1e-06
      %v259 = vrsqrt.pop %v257
      %v260 = vrsqrt.pop %v258
      %v263 = vcombine.low %v259, %v260
      %v265 = vmul.f32 %v236, %v263
      %v266 = vld [vmem:[%s1] sm:$0xf]
      %268 = vset.pattern.permute.xlu0 0
      %269 = vperm.xlu0 %268, %v266
      %v270 = vpop.permute.xlu0 %269
      %v272 = vunpack.c.l.s4 839922192
      %v273 = vunpack.c.0.s8 %v272
      %v274 = vlaneseq
      %v275 = vshrl.u32 %v274, 7
      %v276 = vsub.s32 %v273, %v275
      %v277 = vrot.slane %v270, %v276
      %v279 = vmul.f32 %v265, %v277
      %v280 = vld [vmem:[%s2] sm:$0xf]
      %282 = vset.pattern.permute.xlu0 0
      %283 = vperm.xlu0 %282, %v280
      %v284 = vpop.permute.xlu0 %283
      %v286 = vunpack.c.l.s4 839922192
      %v287 = vunpack.c.0.s8 %v286
      %v288 = vlaneseq
      %v289 = vshrl.u32 %v288, 7
      %v290 = vsub.s32 %v287, %v289
      %v291 = vrot.slane %v284, %v290
      %v293 = vadd.f32 %v279, %v291
      %294 = vst [vmem:[%s208] sm:$0xff] %v293
      %s295 = smul.u32 2, %s19
      %p296 = scmp.lt.s32.totalorder %s18, 1
      %s297 = scalar_select %p296, %s18, 1
      %p298 = scmp.lt.s32.totalorder %s295, 1
      %s299 = scalar_select %p298, %s295, 1
      %s300 = smul.addr %s297, 2
      %s301 = sadd.s32 %s299, %s300
      %s302 = smul.addr %s301, 4
      %s303 = scalar_lea.vmem %s3, %s302
      // Predicated region
      $region33: #{layernorm2d.1} parent=31 // pred_check
        %p304 = pneg %p116
      $region34: #{layernorm2d.1} parent=31 // pred_check_branch
        %306 = sbr.rel (%p304) target = $region36
      $region35: #{layernorm2d.1} parent=31 // pred_region
        %s307 = smul.u32 2, %s19
      $region36: #{layernorm2d.1} parent=31 // pred_fallthru
        _
    $region32: #{layernorm2d.1} parent=5 // pred_fallthru
      _
    %p308 = scmp.le.s32.totalorder 2, %s9
    // Predicated region
    $region37: #{layernorm2d.1} parent=5 // pred_check
      %p309 = pneg %p308
    $region38: #{layernorm2d.1} parent=5 // pred_check_branch
      %311 = sbr.rel (%p309) target = $region40
    $region39: #{layernorm2d.1} parent=5 // pred_region
      %s312 = ssub.s32 %s9, 2
      // Predicated region
      $region41: #{layernorm2d.1} parent=39 // pred_check
        %p313 = pneg %p122
      $region42: #{layernorm2d.1} parent=39 // pred_check_branch
        %315 = sbr.rel (%p313) target = $region44
      $region43: #{layernorm2d.1} parent=39 // pred_region
        %s316 = smul.u32 2, %s21
        %p317 = scmp.lt.s32.totalorder %s20, 1
        %s318 = scalar_select %p317, %s20, 1
        %p319 = scmp.lt.s32.totalorder %s316, 1
        %s320 = scalar_select %p319, %s316, 1
        %s321 = smul.addr %s318, 2
        %s322 = sadd.s32 %s320, %s321
        %s323 = smul.addr %s322, 4
        %s324 = scalar_lea.vmem %s3, %s323
      $region44: #{layernorm2d.1} parent=39 // pred_fallthru
        _
    $region40: #{layernorm2d.1} parent=5 // pred_fallthru
      _
  $region6: #{layernorm2d.1} parent=0 // loop_footer
    %s13 = sadd.s32 1, %s9
  $region7: #{layernorm2d.1} parent=0 // loop_footer_branch
    %8 = sbr.rel target = $region3
  $region8: #{layernorm2d.1} parent=0 // loop_exit
    _

</llo_original>
